<compile_context>
chip_gen: v6e
topology: v6e:2x2x1
jax: 0.10.0
libtpu: 0.0.40
codegen_flags: <defaults>
</compile_context>

<pallas_src>
import math

import jax
import jax.numpy as jnp
from jax.experimental import pallas as pl
from jax.experimental.pallas import tpu as pltpu


def _copy_kernel(x_ref, o_ref):
    # Pure lane-dense memcpy of one tile; all reshaping happens in the wrapper.
    o_ref[...] = x_ref[...]


# 2 MiB per block -> <= 8 MiB resident (double-buffered in+out), safely under
# the 16 / 32 / 32 MiB scoped-VMEM defaults on v5e / v6e / v7x.
_TILE_BYTES = 2 << 20


def _sublane_multiple(itemsize: int) -> int:
    # dtype-aware min sublane tile: f32 -> 8, bf16/f16 -> 16, int8/fp8 -> 32.
    return {4: 8, 2: 16, 1: 32}.get(itemsize, 8)


def _choose_slab(total: int, sub: int):
    """Pick a lane-dense (rows, cols) factorization of `total`, or None."""
    shallow = None
    for cols in (2048, 1024, 512, 256, 128):
        if total % cols:
            continue
        rows = total // cols
        if rows >= sub:
            return rows, cols          # lane-dense and sublane-dense
        if shallow is None:
            shallow = (rows, cols)     # tiny input: lane-dense, few rows
    return shallow


def _row_tile(rows: int, row_bytes: int, sub: int) -> int:
    """Rows per block: byte-budgeted, a multiple of `sub`; ragged last block OK."""
    tr = max(sub, (_TILE_BYTES // max(row_bytes, 1)) // sub * sub)
    if tr < rows:
        return tr                      # grid has >= 2 steps automatically
    if rows > 2 * sub:
        # Fits in one block; split in two (rounded up to a sublane multiple)
        # so the row axis can shard across both v7x TensorCores.
        half = -(-rows // 2)
        return -(-half // sub) * sub
    return rows                        # full-extent block (legal for any rows)


def flatten(x: jax.Array) -> jax.Array:
    """Pallas equivalent of Flatten.forward: (N, ...) -> (N, prod(...))."""
    n = x.shape[0]
    flat = math.prod(x.shape[1:]) if x.ndim > 1 else 1
    total = n * flat
    itemsize = jnp.dtype(x.dtype).itemsize
    sub = _sublane_multiple(itemsize)
    cost = pl.CostEstimate(flops=0, transcendentals=0,
                           bytes_accessed=2 * total * itemsize)

    # TODO(synk): with caller-side donation, input_output_aliases={0:0} plus a
    # pl.ANY no-op body would make this O(1); kept as a streaming copy since
    # donation cannot be guaranteed from inside this wrapper.

    slab = _choose_slab(total, sub)

    if slab is not None:
        rows, cols = slab
        tr = _row_tile(rows, cols * itemsize, sub)
        # Metadata-only reshape: lane-dense 2D slab, full-width blocks so each
        # DMA is a single contiguous stride-1 chunk.
        x2 = x.reshape(rows, cols)
        out = pl.pallas_call(
            _copy_kernel,
            out_shape=jax.ShapeDtypeStruct((rows, cols), x.dtype),
            grid=(pl.cdiv(rows, tr),),
            in_specs=[pl.BlockSpec((tr, cols), lambda i: (i, 0))],
            out_specs=pl.BlockSpec((tr, cols), lambda i: (i, 0)),
            compiler_params=pltpu.CompilerParams(
                dimension_semantics=("parallel",)),
            cost_estimate=cost,
        )(x2)
        return out.reshape(n, flat)

    # Fallback: total not lane-factorizable. Tile the (n, flat) view directly
    # with ragged edge blocks (Pallas masks them); never single-block the whole
    # tensor, so VMEM stays bounded regardless of input size.
    x2 = x.reshape(n, flat)
    tc = flat if flat <= 2048 else 2048      # full extent or a 128-multiple
    tr = _row_tile(n, tc * itemsize, sub)
    return pl.pallas_call(
        _copy_kernel,
        out_shape=jax.ShapeDtypeStruct((n, flat), x.dtype),
        grid=(pl.cdiv(n, tr), pl.cdiv(flat, tc)),
        in_specs=[pl.BlockSpec((tr, tc), lambda i, j: (i, j))],
        out_specs=pl.BlockSpec((tr, tc), lambda i, j: (i, j)),
        compiler_params=pltpu.CompilerParams(
            dimension_semantics=("parallel", "parallel")),
        cost_estimate=cost,
    )(x2)


if __name__ == "__main__":
    key = jax.random.PRNGKey(0)
    # Small NCHW input consistent with a typical conv feature map.
    x = jax.random.normal(key, (2, 4, 16, 16), dtype=jnp.float32)

    y = flatten(x)
    y = jax.block_until_ready(y)

    # Sanity check against the pure-JAX reference (torch .view(N, -1)).
    ref = x.reshape(x.shape[0], -1)
    assert y.shape == (2, 4 * 16 * 16), y.shape
    assert y.dtype == x.dtype
    assert jnp.array_equal(y, ref)

    print("KERNEL_OK")
</pallas_src>

<mosaic_0001>
module attributes {stable_mosaic.version = 11 : i64} {
  func.func @_copy_kernel(%arg0: i32, %arg1: memref<8x256xf32, #tpu.memory_space<vmem>>, %arg2: memref<8x256xf32, #tpu.memory_space<vmem>>) attributes {dimension_semantics = [#tpu.dimension_semantics<parallel>], iteration_bounds = array<i64: 1>, scalar_prefetch = 0 : i64, scratch_operands = 0 : i64, tpu.core_type = #tpu.core_type<tc>, window_params = [{transform_indices = @transform_0, window_bounds = array<i64: 8, 256>}, {transform_indices = @transform_1, window_bounds = array<i64: 8, 256>}]} {
    %c0 = arith.constant 0 : index
    %c0_0 = arith.constant 0 : index
    %0 = vector.load %arg1[%c0, %c0_0] : memref<8x256xf32, #tpu.memory_space<vmem>>, vector<8x256xf32>
    %c0_1 = arith.constant 0 : index
    %c0_2 = arith.constant 0 : index
    %1 = vector.load %arg2[%c0_1, %c0_2] : memref<8x256xf32, #tpu.memory_space<vmem>>, vector<8x256xf32>
    tpu.vector_store %arg2[%c0_1, %c0_2], %0 {strides = array<i32>} : memref<8x256xf32, #tpu.memory_space<vmem>>, vector<8x256xf32>,
    return
  }
  func.func @transform_0(%arg0: i32) -> (i32, i32) {
    %c0_i32 = arith.constant 0 : i32
    %c0_i32_0 = arith.constant 0 : i32
    return %arg0, %c0_i32 : i32, i32
  }
  func.func @transform_1(%arg0: i32) -> (i32, i32) {
    %c0_i32 = arith.constant 0 : i32
    %c0_i32_0 = arith.constant 0 : i32
    return %arg0, %c0_i32 : i32, i32
  }
}

</mosaic_0001>

<llo_original>
// kernel: tpu_custom_call.1
$region0: #{tpu_custom_call.1}
  #allocation0 [shape = 'u32[]', space=smem, size = 0x4, offset = 0x4, fixed_abs, tag = 'smem constant byte address 0x4 - core index']
  #allocation1 [shape = 'u32[144,128]{1,0:T(1,128)}', space=vmem, size = 0x12000, scoped, tag = 'internal scratch']
  %s0 = inlined_call_operand.hbm [shape: f32[8,256], index: 0, kind: input, shape index: {}]
  %s1 = inlined_call_operand.hbm [shape: f32[8,256], index: 1, kind: output, shape index: {}]
  %s2 = sld [smem:[#allocation0]]
  $region18: #{tpu_custom_call.1} parent=0
    _
  %s4 = ssub.s32 1, %s2
  %s5 = scalar_select 0, %s4, %s2
  $region1: #{tpu_custom_call.1} parent=0
    #allocation2 [shape = 'u8[8192]{0}', space=vmem, size = 0x2000, scoped, tag = 'input window, operand 0, single buffered']
    #allocation3 [shape = 's32[1]{0}', space=sflag, size = 0x4, scoped, tag = 'scoped memory for tpu_custom_call.1']
    #allocation4 [shape = 's32[1]{0}', space=sflag, size = 0x4, scoped, tag = 'scoped memory for tpu_custom_call.1']
    #allocation5 [shape = 'u8[8192]{0}', space=vmem, size = 0x2000, scoped, tag = 'output window, operand 0, single buffered']
    %6 = vsyncpa [#allocation3], 0
    %7 = vsyncpa [#allocation4], 0
    // Predicated region
    $region2: #{tpu_custom_call.1} parent=1 // pred_check
      _
    $region3: #{tpu_custom_call.1} parent=1 // pred_check_branch
      %9 = sbr.rel (0) target = $region5
    $region4: #{tpu_custom_call.1} parent=1 // pred_region
      %s11 = ssub.s32 256, 256
      %12 = vsyncadd [#allocation3], %s11
      %s14 = sshll.u32 [#allocation2], 4
      %s15 = int_to_ptr.vmem [resolvable:$true] %s14
      %17 = dma.hbm_to_vmem [thread:$0]  %s0, 256, %s15, [#allocation3]
    $region5: #{tpu_custom_call.1} parent=1 // pred_fallthru
      _
    // Predicated region
    $region6: #{tpu_custom_call.1} parent=1 // pred_check
      _
    $region7: #{tpu_custom_call.1} parent=1 // pred_check_branch
      %19 = sbr.rel (0) target = $region9
    $region8: #{tpu_custom_call.1} parent=1 // pred_region
      %20 = dma.done [#allocation3], 256
    $region9: #{tpu_custom_call.1} parent=1 // pred_fallthru
      _
    %v21 = vld [vmem:[#allocation2] sm:$0xff]
    %v22 = vld [vmem:[#allocation2 + $0x8] sm:$0xff]
    %23 = vst [vmem:[#allocation5] sm:$0xff] %v21
    %24 = vst [vmem:[#allocation5 + $0x8] sm:$0xff] %v22
    // Predicated region
    $region10: #{tpu_custom_call.1} parent=1 // pred_check
      _
    $region11: #{tpu_custom_call.1} parent=1 // pred_check_branch
      %26 = sbr.rel (0) target = $region13
    $region12: #{tpu_custom_call.1} parent=1 // pred_region
      %s28 = ssub.s32 256, 256
      %29 = vsyncadd [#allocation4], %s28
      %s31 = sshll.u32 [#allocation5], 4
      %s32 = int_to_ptr.vmem [resolvable:$true] %s31
      %34 = dma.vmem_to_hbm [thread:$0]  %s32, 256, %s1, [#allocation4]
    $region13: #{tpu_custom_call.1} parent=1 // pred_fallthru
      _
    // Predicated region
    $region14: #{tpu_custom_call.1} parent=1 // pred_check
      _
    $region15: #{tpu_custom_call.1} parent=1 // pred_check_branch
      %36 = sbr.rel (0) target = $region17
    $region16: #{tpu_custom_call.1} parent=1 // pred_region
      %37 = dma.done [#allocation4], 256
    $region17: #{tpu_custom_call.1} parent=1 // pred_fallthru
      _
    %38 = vsyncpa [#allocation3], 1
    %39 = vsyncpa [#allocation4], 1

</llo_original>
